<compile_context>
chip_gen: v5e
topology: v5e:2x2
jax: 0.10.0
libtpu: 0.0.40
codegen_flags: <defaults>
</compile_context>

<pallas_src>
import jax
import jax.numpy as jnp
from jax.experimental import pallas as pl
from jax.experimental.pallas import tpu as pltpu


def _round_up(x, m):
    return (x + m - 1) // m * m


# --------------------------------------------------------------------------
# One-time parameter fusion (hoisted out of the forward pass).
# --------------------------------------------------------------------------
def fuse_head_params(w_cls, b_cls, w_bbox, b_bbox):
    """Fuse the two linear heads into one lane-dense weight/bias pair.

    w_cls  : (C, num_classes)     b_cls  : (num_classes,)
    w_bbox : (C, 4*num_classes)   b_bbox : (4*num_classes,)

    Returns a dict with:
      w_bf16  : (C, kc_pad + kb_pad) bf16   fused, per-head lane-padded weights
      b_f32   : (1, kc_pad + kb_pad) f32    fused, per-head lane-padded biases
      kc, kb  : true output widths (num_classes, 4*num_classes)
      kc_pad, kb_pad : 128-multiple padded widths
    """
    c, kc = w_cls.shape
    kb = w_bbox.shape[1]
    kc_pad = _round_up(kc, 128)
    kb_pad = _round_up(kb, 128)

    w_cls_p = jnp.pad(w_cls, ((0, 0), (0, kc_pad - kc)))
    w_bbox_p = jnp.pad(w_bbox, ((0, 0), (0, kb_pad - kb)))
    b_cls_p = jnp.pad(b_cls, (0, kc_pad - kc))
    b_bbox_p = jnp.pad(b_bbox, (0, kb_pad - kb))

    w = jnp.concatenate([w_cls_p, w_bbox_p], axis=1).astype(jnp.bfloat16)
    b = jnp.concatenate([b_cls_p, b_bbox_p], axis=0).reshape(1, kc_pad + kb_pad)
    b = b.astype(jnp.float32)
    return {
        "w_bf16": w, "b_f32": b,
        "kc": kc, "kb": kb, "kc_pad": kc_pad, "kb_pad": kb_pad,
        "in_channels": c,
    }


# --------------------------------------------------------------------------
# Kernel: one fused matmul, two lane-dense stores.
# --------------------------------------------------------------------------
def _fused_head_kernel(x_ref, w_ref, b_ref, scores_ref, bbox_ref):
    # x: (TM, C) f32  -> cast to bf16 on the VPU (free, kernel is DMA-bound)
    # w: (C, K_pad) bf16, b: (1, K_pad) f32
    x_bf = x_ref[...].astype(jnp.bfloat16)
    acc = jnp.dot(x_bf, w_ref[...], preferred_element_type=jnp.float32)
    acc = acc + b_ref[...]
    kc_pad = scores_ref.shape[-1]
    # split at a 128-aligned (vreg-aligned) column boundary -> both stores
    # remain unmasked / lane-dense.
    scores_ref[...] = acc[:, :kc_pad].astype(scores_ref.dtype)
    bbox_ref[...] = acc[:, kc_pad:].astype(bbox_ref.dtype)


# --------------------------------------------------------------------------
# Forward wrapper (FastRCNNPredictor.forward).
# --------------------------------------------------------------------------
def fast_rcnn_predictor(x, fused, *, row_tile=1024):
    """Pallas-backed FastRCNNPredictor.forward.

    x      : (N, C) or (N, C, 1, 1) float32
    fused  : output of fuse_head_params (precomputed once, not per call)
    returns: (scores (N, num_classes), bbox_deltas (N, 4*num_classes)) f32
    """
    if x.ndim == 4:
        assert list(x.shape[2:]) == [1, 1], \
            "4D input to FastRCNNPredictor must have spatial dims (1, 1)"
    x2d = x.reshape(x.shape[0], -1)          # flatten(start_dim=1)
    n, c = x2d.shape

    w = fused["w_bf16"]
    b = fused["b_f32"]
    kc, kb = fused["kc"], fused["kb"]
    kc_pad, kb_pad = fused["kc_pad"], fused["kb_pad"]
    k_pad = kc_pad + kb_pad
    assert c == fused["in_channels"]

    # --- row tiling over N (no explicit row padding: Pallas masks the
    # partial last tile's out-of-bounds writes) ------------------------------
    tm = min(row_tile, _round_up(max(n, 1), 8))
    if n > 512:
        # keep >= 2 grid steps so both v7x TensorCores get work; also halves
        # per-core VMEM working set.  256-row granularity keeps tiles aligned.
        tm = min(tm, max(256, _round_up(-(-n // 2), 256)))
    grid = (pl.cdiv(n, tm),)

    cost = pl.CostEstimate(
        flops=2 * n * c * k_pad,
        transcendentals=0,
        bytes_accessed=(n * c * 4                 # x (f32, read once)
                        + c * k_pad * 2           # fused weights (bf16)
                        + k_pad * 4               # fused bias (f32)
                        + n * k_pad * 4),         # outputs (f32)
    )

    scores_p, bbox_p = pl.pallas_call(
        _fused_head_kernel,
        out_shape=(jax.ShapeDtypeStruct((n, kc_pad), jnp.float32),
                   jax.ShapeDtypeStruct((n, kb_pad), jnp.float32)),
        grid=grid,
        in_specs=[
            pl.BlockSpec((tm, c), lambda i: (i, 0)),        # x: tiled over rows
            pl.BlockSpec((c, k_pad), lambda i: (0, 0)),     # fused weights: resident
            pl.BlockSpec((1, k_pad), lambda i: (0, 0)),     # fused bias: resident
        ],
        out_specs=[
            pl.BlockSpec((tm, kc_pad), lambda i: (i, 0)),   # scores (lane-dense)
            pl.BlockSpec((tm, kb_pad), lambda i: (i, 0)),   # bbox   (lane-dense)
        ],
        compiler_params=pltpu.CompilerParams(
            dimension_semantics=("parallel",),              # 2 TCs on v7x
        ),
        cost_estimate=cost,
    )(x2d, w, b)

    # strip the per-head lane padding (each slice only touches its own buffer)
    scores = scores_p[:, :kc]
    bbox_deltas = bbox_p[:, :kb]
    return scores, bbox_deltas


# --------------------------------------------------------------------------
# Deterministic nn.Linear-style init (uniform +-1/sqrt(in_channels)).
# --------------------------------------------------------------------------
def init_params(key, in_channels, num_classes):
    k1, k2, k3, k4 = jax.random.split(key, 4)
    bound = 1.0 / jnp.sqrt(jnp.float32(in_channels))
    w_cls = jax.random.uniform(k1, (in_channels, num_classes),
                               jnp.float32, -bound, bound)
    b_cls = jax.random.uniform(k2, (num_classes,), jnp.float32, -bound, bound)
    w_bbox = jax.random.uniform(k3, (in_channels, num_classes * 4),
                                jnp.float32, -bound, bound)
    b_bbox = jax.random.uniform(k4, (num_classes * 4,),
                                jnp.float32, -bound, bound)
    return w_cls, b_cls, w_bbox, b_bbox


if __name__ == "__main__":
    in_channels = 32
    num_classes = 5        # including background
    n_rois = 4

    key = jax.random.PRNGKey(0)
    kx, kp = jax.random.split(key)

    # Input as produced by TwoMLPHead -> (N, C); (N, C, 1, 1) also accepted.
    x = jax.random.normal(kx, (n_rois, in_channels, 1, 1), jnp.float32)
    w_cls, b_cls, w_bbox, b_bbox = init_params(kp, in_channels, num_classes)

    # One-time weight fusion (hoisted out of the forward pass).
    fused = fuse_head_params(w_cls, b_cls, w_bbox, b_bbox)

    scores, bbox_deltas = fast_rcnn_predictor(x, fused)
    jax.block_until_ready((scores, bbox_deltas))

    # --- reference checks ----------------------------------------------------
    x2d = x.reshape(n_rois, -1)

    # exact-path reference: same bf16 operand quantization, f32 accumulation
    xq = x2d.astype(jnp.bfloat16).astype(jnp.float32)
    wcq = w_cls.astype(jnp.bfloat16).astype(jnp.float32)
    wbq = w_bbox.astype(jnp.bfloat16).astype(jnp.float32)
    ref_scores_q = xq @ wcq + b_cls
    ref_bbox_q = xq @ wbq + b_bbox

    # full-precision reference (loose tolerance: bf16 MXU operands by design)
    ref_scores_f = x2d @ w_cls + b_cls
    ref_bbox_f = x2d @ w_bbox + b_bbox

    assert scores.shape == (n_rois, num_classes)
    assert bbox_deltas.shape == (n_rois, num_classes * 4)
    assert jnp.allclose(scores, ref_scores_q, atol=1e-3, rtol=1e-3)
    assert jnp.allclose(bbox_deltas, ref_bbox_q, atol=1e-3, rtol=1e-3)
    assert jnp.allclose(scores, ref_scores_f, atol=5e-2, rtol=5e-2)
    assert jnp.allclose(bbox_deltas, ref_bbox_f, atol=5e-2, rtol=5e-2)

    print("KERNEL_OK")
</pallas_src>

<mosaic_0001>
module attributes {stable_mosaic.version = 11 : i64} {
  func.func @_fused_head_kernel(%arg0: i32, %arg1: memref<8x32xf32, #tpu.memory_space<vmem>>, %arg2: memref<32x256xbf16, #tpu.memory_space<vmem>>, %arg3: memref<1x256xf32, #tpu.memory_space<vmem>>, %arg4: memref<8x128xf32, #tpu.memory_space<vmem>>, %arg5: memref<8x128xf32, #tpu.memory_space<vmem>>) attributes {dimension_semantics = [#tpu.dimension_semantics<parallel>], iteration_bounds = array<i64: 1>, scalar_prefetch = 0 : i64, scratch_operands = 0 : i64, tpu.core_type = #tpu.core_type<tc>, window_params = [{transform_indices = @transform_0, window_bounds = array<i64: 8, 32>}, {pipeline_mode = #tpu.pipeline_mode<synchronous>, transform_indices = @transform_1, window_bounds = array<i64: 32, 256>}, {pipeline_mode = #tpu.pipeline_mode<synchronous>, transform_indices = @transform_2, window_bounds = array<i64: 1, 256>}, {transform_indices = @transform_3, window_bounds = array<i64: 8, 128>}, {transform_indices = @transform_4, window_bounds = array<i64: 8, 128>}]} {
    %c0 = arith.constant 0 : index
    %c0_0 = arith.constant 0 : index
    %0 = vector.load %arg1[%c0, %c0_0] : memref<8x32xf32, #tpu.memory_space<vmem>>, vector<8x32xf32>
    %1 = arith.truncf %0 : vector<8x32xf32> to vector<8x32xbf16>
    %c0_1 = arith.constant 0 : index
    %c0_2 = arith.constant 0 : index
    %2 = vector.load %arg2[%c0_1, %c0_2] : memref<32x256xbf16, #tpu.memory_space<vmem>>, vector<32x256xbf16>
    %cst = arith.constant dense<0.000000e+00> : vector<8x256xf32>
    %3 = tpu.matmul %1, %2, %cst {dimension_numbers = #tpu.dot_dimension_numbers<[1], [0], [0], [1], [0, 0, 1, 1], [], []>} : vector<8x32xbf16>, vector<32x256xbf16>, vector<8x256xf32> -> vector<8x256xf32>
    %c0_3 = arith.constant 0 : index
    %c0_4 = arith.constant 0 : index
    %4 = vector.load %arg3[%c0_3, %c0_4] : memref<1x256xf32, #tpu.memory_space<vmem>>, vector<1x256xf32>
    %5 = vector.broadcast %4 : vector<1x256xf32> to vector<8x256xf32>
    %6 = arith.addf %3, %5 : vector<8x256xf32>
    %7 = vector.extract_strided_slice %6 {offsets = [0, 0], sizes = [8, 128], strides = [1, 1]} : vector<8x256xf32> to vector<8x128xf32>
    %c0_5 = arith.constant 0 : index
    %c0_6 = arith.constant 0 : index
    %8 = vector.load %arg4[%c0_5, %c0_6] : memref<8x128xf32, #tpu.memory_space<vmem>>, vector<8x128xf32>
    tpu.vector_store %arg4[%c0_5, %c0_6], %7 {strides = array<i32>} : memref<8x128xf32, #tpu.memory_space<vmem>>, vector<8x128xf32>,
    %9 = vector.extract_strided_slice %6 {offsets = [0, 128], sizes = [8, 128], strides = [1, 1]} : vector<8x256xf32> to vector<8x128xf32>
    %c0_7 = arith.constant 0 : index
    %c0_8 = arith.constant 0 : index
    %10 = vector.load %arg5[%c0_7, %c0_8] : memref<8x128xf32, #tpu.memory_space<vmem>>, vector<8x128xf32>
    tpu.vector_store %arg5[%c0_7, %c0_8], %9 {strides = array<i32>} : memref<8x128xf32, #tpu.memory_space<vmem>>, vector<8x128xf32>,
    return
  }
  func.func @transform_0(%arg0: i32) -> (i32, i32) {
    %c0_i32 = arith.constant 0 : i32
    %c0_i32_0 = arith.constant 0 : i32
    return %arg0, %c0_i32 : i32, i32
  }
  func.func @transform_1(%arg0: i32) -> (i32, i32) {
    %c0_i32 = arith.constant 0 : i32
    %c0_i32_0 = arith.constant 0 : i32
    %c0_i32_1 = arith.constant 0 : i32
    return %c0_i32, %c0_i32_0 : i32, i32
  }
  func.func @transform_2(%arg0: i32) -> (i32, i32) {
    %c0_i32 = arith.constant 0 : i32
    %c0_i32_0 = arith.constant 0 : i32
    %c0_i32_1 = arith.constant 0 : i32
    return %c0_i32, %c0_i32_0 : i32, i32
  }
  func.func @transform_3(%arg0: i32) -> (i32, i32) {
    %c0_i32 = arith.constant 0 : i32
    %c0_i32_0 = arith.constant 0 : i32
    return %arg0, %c0_i32 : i32, i32
  }
  func.func @transform_4(%arg0: i32) -> (i32, i32) {
    %c0_i32 = arith.constant 0 : i32
    %c0_i32_0 = arith.constant 0 : i32
    return %arg0, %c0_i32 : i32, i32
  }
}

</mosaic_0001>

<llo_original>
// kernel: tpu_custom_call.1
$region0: #{tpu_custom_call.1}
  #allocation0 [shape = 'u32[]', space=smem, size = 0x4, offset = 0x4, fixed_abs, tag = 'smem constant byte address 0x4 - core index']
  #allocation1 [shape = 'u32[72,128]{1,0:T(1,128)}', space=vmem, size = 0x9000, scoped, tag = 'internal scratch']
  %s0 = inlined_call_operand.hbm [shape: f32[4,32], index: 0, kind: input, shape index: {}]
  %s1 = inlined_call_operand.hbm [shape: bf16[32,256], index: 1, kind: input, shape index: {}]
  %s2 = inlined_call_operand.hbm [shape: f32[1,256], index: 2, kind: input, shape index: {}]
  %s3 = inlined_call_operand.hbm [shape: f32[4,128], index: 3, kind: output, shape index: {0}]
  %s4 = inlined_call_operand.hbm [shape: f32[4,128], index: 4, kind: output, shape index: {1}]
  %5 = xla_tuple %s3, %s4
  %s6 = sld [smem:[#allocation0]]
  $region42: #{tpu_custom_call.1} parent=0
    _
  %s8 = ssub.s32 1, %s6
  %s9 = scalar_select 0, %s8, %s6
  $region1: #{tpu_custom_call.1} parent=0
    #allocation2 [shape = 'u8[4096]{0}', space=vmem, size = 0x1000, scoped, tag = 'input window, operand 0, single buffered']
    #allocation3 [shape = 's32[1]{0}', space=sflag, size = 0x4, scoped, tag = 'scoped memory for tpu_custom_call.1']
    #allocation4 [shape = 's32[1]{0}', space=sflag, size = 0x4, scoped, tag = 'scoped memory for tpu_custom_call.1']
    #allocation5 [shape = 'u8[16384]{0}', space=vmem, size = 0x4000, scoped, tag = 'input window, operand 1, single buffered']
    #allocation6 [shape = 's32[1]{0}', space=sflag, size = 0x4, scoped, tag = 'scoped memory for tpu_custom_call.1']
    #allocation7 [shape = 'u8[1024]{0}', space=vmem, size = 0x400, scoped, tag = 'input window, operand 2, single buffered']
    #allocation8 [shape = 'u8[4096]{0}', space=vmem, size = 0x1000, scoped, tag = 'output window, operand 0, single buffered']
    #allocation9 [shape = 'u8[4096]{0}', space=vmem, size = 0x1000, scoped, tag = 'output window, operand 1, single buffered']
    #allocation10 [shape = 's32[1]{0}', space=sflag, size = 0x4, scoped, tag = 'scoped memory for tpu_custom_call.1']
    %10 = vsyncpa [#allocation3], 0
    %11 = vsyncpa [#allocation6], 0
    %12 = vsyncpa [#allocation4], 0
    %13 = vsyncpa [#allocation10], 0
    // Predicated region
    $region2: #{tpu_custom_call.1} parent=1 // pred_check
      _
    $region3: #{tpu_custom_call.1} parent=1 // pred_check_branch
      %15 = sbr.rel (0) target = $region5
    $region4: #{tpu_custom_call.1} parent=1 // pred_region
      %17 = vsyncadd [#allocation3], 64
      %s18 = sshll.u32 %s0, 4
      %s19 = int_to_ptr.hbm [resolvable:$true] %s18
      %s20 = sshll.u32 [#allocation2], 4
      %s21 = int_to_ptr.vmem [resolvable:$true] %s20
      %26 = dma.hbm_to_vmem [thread:$0]  %s19, 64, %s21, [#allocation3], 64, 64, 4
    $region5: #{tpu_custom_call.1} parent=1 // pred_fallthru
      _
    // Predicated region
    $region6: #{tpu_custom_call.1} parent=1 // pred_check
      _
    $region7: #{tpu_custom_call.1} parent=1 // pred_check_branch
      %28 = sbr.rel (0) target = $region9
    $region8: #{tpu_custom_call.1} parent=1 // pred_region
      %30 = vsyncadd [#allocation6], 0
      %s31 = sshll.u32 %s1, 4
      %s32 = int_to_ptr.hbm [resolvable:$true] %s31
      %s33 = sshll.u32 [#allocation5], 4
      %s34 = int_to_ptr.vmem [resolvable:$true] %s33
      %39 = dma.hbm_to_vmem [thread:$0]  %s32, 512, %s34, [#allocation6], 128, 128, 8
    $region9: #{tpu_custom_call.1} parent=1 // pred_fallthru
      _
    // Predicated region
    $region10: #{tpu_custom_call.1} parent=1 // pred_check
      _
    $region11: #{tpu_custom_call.1} parent=1 // pred_check_branch
      %41 = sbr.rel (0) target = $region13
    $region12: #{tpu_custom_call.1} parent=1 // pred_region
      %43 = vsyncadd [#allocation6], 0
      %s45 = sshll.u32 %s2, 4
      %s46 = int_to_ptr.hbm [resolvable:$true] %s45
      %s47 = sshll.u32 [#allocation7], 4
      %s48 = int_to_ptr.vmem [resolvable:$true] %s47
      %50 = dma.hbm_to_vmem [thread:$0]  %s46, 32, %s48, [#allocation6]
    $region13: #{tpu_custom_call.1} parent=1 // pred_fallthru
      _
    // Predicated region
    $region14: #{tpu_custom_call.1} parent=1 // pred_check
      _
    $region15: #{tpu_custom_call.1} parent=1 // pred_check_branch
      %52 = sbr.rel (0) target = $region17
    $region16: #{tpu_custom_call.1} parent=1 // pred_region
      %54 = dma.done [#allocation3], 128
    $region17: #{tpu_custom_call.1} parent=1 // pred_fallthru
      _
    // Predicated region
    $region18: #{tpu_custom_call.1} parent=1 // pred_check
      _
    $region19: #{tpu_custom_call.1} parent=1 // pred_check_branch
      %56 = sbr.rel (0) target = $region21
    $region20: #{tpu_custom_call.1} parent=1 // pred_region
      %58 = dma.done [#allocation6], 512
    $region21: #{tpu_custom_call.1} parent=1 // pred_fallthru
      _
    // Predicated region
    $region22: #{tpu_custom_call.1} parent=1 // pred_check
      _
    $region23: #{tpu_custom_call.1} parent=1 // pred_check_branch
      %60 = sbr.rel (0) target = $region25
    $region24: #{tpu_custom_call.1} parent=1 // pred_region
      %62 = dma.done [#allocation6], 32
    $region25: #{tpu_custom_call.1} parent=1 // pred_fallthru
      _
    %v64 = vld [vmem:[#allocation2] sm:$0xff]
    %v65 = vpack.c.bf16 %v64, %v64
    %v66 = vld [vmem:[#allocation5] sm:$0xff]
    %v67 = vld [vmem:[#allocation5 + $0x8] sm:$0xff]
    %v68 = vld [vmem:[#allocation5 + $0x10] sm:$0xff]
    %v69 = vld [vmem:[#allocation5 + $0x18] sm:$0xff]
    %v70 = vld [vmem:[#allocation7] sm:$0x3]
    %v72 = vperm.slane %v70, 0
    %v73 = vperm.slane %v70, 1
    %v80 = vunpack.c.l.b16 %v66
    %v81 = vunpack.c.h.b16 %v66
    %v82 = vunpack.c.l.b16 %v67
    %v83 = vunpack.c.h.b16 %v67
    %v84 = vunpack.c.l.b16 %v68
    %v85 = vunpack.c.h.b16 %v68
    %v86 = vunpack.c.l.b16 %v69
    %v87 = vunpack.c.h.b16 %v69
    %v88 = vpack.c.b16 %v82, %v80
    %v89 = vpack.c.b16 %v83, %v81
    %v90 = vpack.c.b16 %v86, %v84
    %v91 = vpack.c.b16 %v87, %v85
    %vm96 = vcmask 261120
    %v98 = vsel %vm96, %v65, 0
    %100 = vmatpush.bf16.msra.mxu0 0
    %101 = vmatpush.bf16.msra.mxu0 0
    %102 = vmatpush.bf16.msra.mxu0 0
    %103 = vmatpush.bf16.msra.mxu0 0
    %104 = vmatpush.bf16.msra.mxu0 0
    %105 = vmatpush.bf16.msra.mxu0 0
    %106 = vmatpush.bf16.msra.mxu0 %v90
    %107 = vmatpush.bf16.msra.mxu0 %v88
    %108 = vmatmul.bf16.gmra.mxu0 %v98
    %v109 = vpop.f32.mrf.mxu0
    %v110 = vadd.f32 %v72, %v109
    %v111 = vpop.f32.mrf.mxu0
    %112 = vdwg.mxu0
    %113 = vmatpush.bf16.msra.mxu0 0
    %114 = vmatpush.bf16.msra.mxu0 0
    %115 = vmatpush.bf16.msra.mxu0 0
    %116 = vmatpush.bf16.msra.mxu0 0
    %117 = vmatpush.bf16.msra.mxu0 0
    %118 = vmatpush.bf16.msra.mxu0 0
    %119 = vmatpush.bf16.msra.mxu0 %v91
    %120 = vmatpush.bf16.msra.mxu0 %v89
    %121 = vmatmul.bf16.gmra.mxu0 %v98
    %v122 = vpop.f32.mrf.mxu0
    %v123 = vadd.f32 %v73, %v122
    %v124 = vpop.f32.mrf.mxu0
    %125 = vdwg.mxu0
    %126 = vst [vmem:[#allocation8] sm:$0xff] %v110
    %127 = vst [vmem:[#allocation9] sm:$0xff] %v123
    // Predicated region
    $region26: #{tpu_custom_call.1} parent=1 // pred_check
      _
    $region27: #{tpu_custom_call.1} parent=1 // pred_check_branch
      %129 = sbr.rel (0) target = $region29
    $region28: #{tpu_custom_call.1} parent=1 // pred_region
      %131 = vsyncadd [#allocation4], 64
      %s132 = sshll.u32 [#allocation8], 4
      %s133 = int_to_ptr.vmem [resolvable:$true] %s132
      %s134 = sshll.u32 %s3, 4
      %s135 = int_to_ptr.hbm [resolvable:$true] %s134
      %140 = dma.vmem_to_hbm [thread:$0]  %s133, 64, %s135, [#allocation4], 64, 64, 4
    $region29: #{tpu_custom_call.1} parent=1 // pred_fallthru
      _
    // Predicated region
    $region30: #{tpu_custom_call.1} parent=1 // pred_check
      _
    $region31: #{tpu_custom_call.1} parent=1 // pred_check_branch
      %142 = sbr.rel (0) target = $region33
    $region32: #{tpu_custom_call.1} parent=1 // pred_region
      %144 = vsyncadd [#allocation10], 64
      %s145 = sshll.u32 [#allocation9], 4
      %s146 = int_to_ptr.vmem [resolvable:$true] %s145
      %s147 = sshll.u32 %s4, 4
      %s148 = int_to_ptr.hbm [resolvable:$true] %s147
      %153 = dma.vmem_to_hbm [thread:$0]  %s146, 64, %s148, [#allocation10], 64, 64, 4
    $region33: #{tpu_custom_call.1} parent=1 // pred_fallthru
      _
    // Predicated region
    $region34: #{tpu_custom_call.1} parent=1 // pred_check
      _
    $region35: #{tpu_custom_call.1} parent=1 // pred_check_branch
      %155 = sbr.rel (0) target = $region37
    $region36: #{tpu_custom_call.1} parent=1 // pred_region
      %157 = dma.done [#allocation4], 128
    $region37: #{tpu_custom_call.1} parent=1 // pred_fallthru
      _
    // Predicated region
    $region38: #{tpu_custom_call.1} parent=1 // pred_check
      _
    $region39: #{tpu_custom_call.1} parent=1 // pred_check_branch
      %159 = sbr.rel (0) target = $region41
    $region40: #{tpu_custom_call.1} parent=1 // pred_region
      %161 = dma.done [#allocation10], 128
    $region41: #{tpu_custom_call.1} parent=1 // pred_fallthru
      _
    %162 = vsyncpa [#allocation3], 1
    %163 = vsyncpa [#allocation6], 1
    %164 = vsyncpa [#allocation4], 1
    %165 = vsyncpa [#allocation10], 1

</llo_original>
